<compile_context>
chip_gen: v7x
topology: tpu7x:2x2x1
jax: 0.10.0
libtpu: 0.0.40
codegen_flags: <defaults>
</compile_context>

<pallas_src>
import jax
import jax.numpy as jnp
from jax.experimental import pallas as pl
from jax.experimental.pallas import tpu as pltpu


def _make_sigmoid_mul_kernel(block_nc):
    def kernel(gate_ref, x_ref, o_ref):
        # gate_ref: (NC, 1) resident; x_ref / o_ref: (block_nc, HW) tile.
        i = pl.program_id(0)
        start = pl.multiple_of(i * block_nc, 8)
        g = gate_ref[pl.ds(start, block_nc), :]
        gate = jax.nn.sigmoid(g.astype(jnp.float32))
        # Broadcast-multiply in the native dtype of x (bf16 VALU native on v6e/v7x).
        o_ref[...] = (gate.astype(x_ref.dtype) * x_ref[...]).astype(o_ref.dtype)

    return kernel


def _pick_block_nc(nc, hw, dtype):
    """Block size along NC, chosen by bytes rather than block count.

    Prefer an even 2-way split (gives the v7x megacore one block per
    TensorCore; only one extra ~0.35us step on single-TC v5e/v6e) as long as
    each half is sublane-aligned and carries a useful amount of data
    (>= ~256 KiB).  Otherwise fall back to a single full-array block — at this
    problem size the whole slab fits comfortably in scoped VMEM on every
    generation, and extra grid steps are pure overhead.
    """
    itemsize = jnp.dtype(dtype).itemsize
    sublane = 8 if itemsize >= 4 else 16  # bf16/fp8 pack >8 sublanes per vreg
    min_block_bytes = 256 * 1024

    half = nc // 2
    if (
        nc % 2 == 0
        and half % sublane == 0
        and half * hw * itemsize >= min_block_bytes
    ):
        return half
    return nc  # single full-array block (grid of 1)


def sigmoid_mul(x266, x262):
    """x266: [N, C, 1, 1], x262: [N, C, H, W] -> sigmoid(x266) * x262."""
    N, C, H, W = x262.shape
    assert x266.shape == (N, C, 1, 1)

    gate2d = x266.reshape(N * C, 1)
    x2d = x262.reshape(N * C, H * W)
    NC, HW = x2d.shape

    block_nc = _pick_block_nc(NC, HW, x262.dtype)
    grid = (NC // block_nc,)

    itemsize = jnp.dtype(x262.dtype).itemsize
    cost = pl.CostEstimate(
        flops=2 * NC * HW,
        transcendentals=NC,
        bytes_accessed=2 * NC * HW * itemsize + NC * jnp.dtype(x266.dtype).itemsize,
    )

    out2d = pl.pallas_call(
        _make_sigmoid_mul_kernel(block_nc),
        out_shape=jax.ShapeDtypeStruct((NC, HW), x262.dtype),
        grid_spec=pl.GridSpec(
            grid=grid,
            in_specs=[
                # Resident gate: full tensor, constant index map -> DMA'd once.
                pl.BlockSpec((NC, 1), lambda i: (0, 0)),
                pl.BlockSpec((block_nc, HW), lambda i: (i, 0)),
            ],
            out_specs=pl.BlockSpec((block_nc, HW), lambda i: (i, 0)),
        ),
        compiler_params=pltpu.CompilerParams(
            # Row blocks are independent -> shardable across TCs on v7x;
            # harmless no-op on single-TC v5e/v6e.
            dimension_semantics=("parallel",),
        ),
        cost_estimate=cost,
    )(gate2d, x2d)

    return out2d.reshape(N, C, H, W)


if __name__ == "__main__":
    key = jax.random.PRNGKey(0)
    k1, k2 = jax.random.split(key)

    # Shapes from the module: x262 = [1, 1056, 14, 14], x266 = [1, 1056, 1, 1]
    N, C, H, W = 1, 1056, 14, 14
    x262 = jax.random.normal(k1, (N, C, H, W), dtype=jnp.float32)
    x266 = jax.random.normal(k2, (N, C, 1, 1), dtype=jnp.float32)

    out = sigmoid_mul(x266, x262)
    jax.block_until_ready(out)

    # Reference check in plain JAX
    ref = jax.nn.sigmoid(x266) * x262
    assert out.shape == ref.shape
    assert jnp.allclose(out, ref, atol=1e-5, rtol=1e-5)

    print("KERNEL_OK")
</pallas_src>

<mosaic_0001>
module attributes {stable_mosaic.version = 11 : i64} {
  func.func @kernel(%arg0: i32, %arg1: memref<1056x1xf32, #tpu.memory_space<vmem>>, %arg2: memref<528x196xf32, #tpu.memory_space<vmem>>, %arg3: memref<528x196xf32, #tpu.memory_space<vmem>>) attributes {dimension_semantics = [#tpu.dimension_semantics<parallel>], iteration_bounds = array<i64: 2>, scalar_prefetch = 0 : i64, scratch_operands = 0 : i64, tpu.core_type = #tpu.core_type<tc>, window_params = [{pipeline_mode = #tpu.pipeline_mode<synchronous>, transform_indices = @transform_0, window_bounds = array<i64: 1056, 1>}, {transform_indices = @transform_1, window_bounds = array<i64: 528, 196>}, {transform_indices = @transform_2, window_bounds = array<i64: 528, 196>}]} {
    %c528_i32 = arith.constant 528 : i32
    %0 = arith.muli %arg0, %c528_i32 : i32
    %1 = tpu.assume_multiple %0, 8 : i32
    %2 = arith.index_cast %1 : i32 to index
    %c0 = arith.constant 0 : index
    %3 = vector.load %arg1[%2, %c0] : memref<1056x1xf32, #tpu.memory_space<vmem>>, vector<528x1xf32>
    %4 = arith.negf %3 : vector<528x1xf32>
    %5 = math.exp %4 : vector<528x1xf32>
    %cst = arith.constant 1.000000e+00 : f32
    %6 = vector.broadcast %cst : f32 to vector<528x1xf32>
    %7 = arith.addf %6, %5 : vector<528x1xf32>
    %8 = arith.divf %6, %7 : vector<528x1xf32>
    %c0_0 = arith.constant 0 : index
    %c0_1 = arith.constant 0 : index
    %9 = vector.load %arg2[%c0_0, %c0_1] : memref<528x196xf32, #tpu.memory_space<vmem>>, vector<528x196xf32>
    %10 = vector.broadcast %8 : vector<528x1xf32> to vector<528x196xf32>
    %11 = arith.mulf %10, %9 : vector<528x196xf32>
    %c0_2 = arith.constant 0 : index
    %c0_3 = arith.constant 0 : index
    %12 = vector.load %arg3[%c0_2, %c0_3] : memref<528x196xf32, #tpu.memory_space<vmem>>, vector<528x196xf32>
    tpu.vector_store %arg3[%c0_2, %c0_3], %11 {strides = array<i32>} : memref<528x196xf32, #tpu.memory_space<vmem>>, vector<528x196xf32>,
    return
  }
  func.func @transform_0(%arg0: i32) -> (i32, i32) {
    %c0_i32 = arith.constant 0 : i32
    %c0_i32_0 = arith.constant 0 : i32
    %c0_i32_1 = arith.constant 0 : i32
    return %c0_i32, %c0_i32_0 : i32, i32
  }
  func.func @transform_1(%arg0: i32) -> (i32, i32) {
    %c0_i32 = arith.constant 0 : i32
    %c0_i32_0 = arith.constant 0 : i32
    return %arg0, %c0_i32 : i32, i32
  }
  func.func @transform_2(%arg0: i32) -> (i32, i32) {
    %c0_i32 = arith.constant 0 : i32
    %c0_i32_0 = arith.constant 0 : i32
    return %arg0, %c0_i32 : i32, i32
  }
}

</mosaic_0001>

<llo_original>
// kernel: tpu_custom_call.1
$region0: #{tpu_custom_call.1}
  #allocation0 [shape = 'u32[]', space=smem, size = 0x4, offset = 0x4, fixed_abs, tag = 'smem constant byte address 0x4 - core index']
  #allocation1 [shape = 'u32[144,128]{1,0:T(1,128)}', space=vmem, size = 0x12000, scoped, tag = 'internal scratch']
  %s0 = inlined_call_operand.vmem [shape: f32[1056,1], index: 0, kind: input, shape index: {}]
  %s1 = inlined_call_operand.vmem [shape: f32[1056,196], index: 1, kind: input, shape index: {}]
  %s2 = inlined_call_operand.vmem [shape: f32[1056,196], index: 2, kind: output, shape index: {}]
  %s3 = sld [smem:[#allocation0]]
  $region41: #{tpu_custom_call.1} parent=0
    _
  %s5 = ssub.s32 1, %s3
  %s6 = scalar_select 0, %s5, %s3
  loop: start=0, step=1, limit=4
  $region2: #{tpu_custom_call.1} parent=0 // loop_pre_header
    _
  $region3: #{tpu_custom_call.1} parent=0 // loop_header
    %s8 = sphi 0, %s12
    %p9 = scmp.ge.s32.totalorder %s8, 4
    %s16 = sphi 0, %s16
    %s18 = sphi 0, %s16
    %s19 = sphi 0, %s18
    %s33 = sphi 0, %s19
    %s39 = sphi 0, %s41
    %s42 = sphi 0, %s39
    %s43 = sphi 0, %s42
    %s59 = sphi 0, %s43
    %s65 = sphi 0, %s67
    %s68 = sphi 0, %s65
    %s69 = sphi 0, %s68
    %s85 = sphi 0, %s69
  $region4: #{tpu_custom_call.1} parent=0 // loop_header_branch
    %11 = sbr.rel (%p9) target = $region8
  $region5: #{tpu_custom_call.1} parent=0 // loop_body
    %s13 = ssub.s32 %s8, 1
    %s14 = ssub.s32 %s8, 2
    %s15 = sadd.s32 %s8, 1
    %s17 = sadd.s32 %s16, 1
    %p20 = scmp.eq.s32.totalorder %s8, 1
    %p21 = scmp.ne.s32.totalorder %s16, %s18
    %p22 = scmp.eq.s32.totalorder %s8, 0
    %p23 = por %p21, %p22
    %p24 = scmp.ne.s32.totalorder %s16, %s18
    %p25 = scmp.eq.s32.totalorder %s13, 1
    %p26 = por %p24, %p25
    %p27 = scmp.ne.s32.totalorder %s18, %s19
    %p28 = scmp.eq.s32.totalorder %s13, 0
    %p29 = por %p27, %p28
    %p30 = scmp.ne.s32.totalorder %s18, %s19
    %p31 = scmp.eq.s32.totalorder %s14, 1
    %p32 = por %p30, %p31
    %p34 = scmp.ne.s32.totalorder %s19, %s33
    %p35 = scmp.eq.s32.totalorder %s14, 0
    %p36 = por %p34, %p35
    %s37 = ssub.s32 %s8, %s15
    %p38 = scmp.eq.s32.totalorder %s37, 0
    %s40 = sadd.s32 %s39, 1
    %s41 = scalar_select %p38, %s39, %s40
    %p44 = pneg %p38
    %p45 = scmp.eq.s32.totalorder %s8, 1
    %p46 = por %p44, %p45
    %p47 = scmp.ne.s32.totalorder %s39, %s42
    %p48 = scmp.eq.s32.totalorder %s8, 0
    %p49 = por %p47, %p48
    %p50 = scmp.ne.s32.totalorder %s39, %s42
    %p51 = scmp.eq.s32.totalorder %s13, 1
    %p52 = por %p50, %p51
    %p53 = scmp.ne.s32.totalorder %s42, %s43
    %p54 = scmp.eq.s32.totalorder %s13, 0
    %p55 = por %p53, %p54
    %p56 = scmp.ne.s32.totalorder %s42, %s43
    %p57 = scmp.eq.s32.totalorder %s14, 1
    %p58 = por %p56, %p57
    %p60 = scmp.ne.s32.totalorder %s43, %s59
    %p61 = scmp.eq.s32.totalorder %s14, 0
    %p62 = por %p60, %p61
    %s63 = ssub.s32 %s8, %s15
    %p64 = scmp.eq.s32.totalorder %s63, 0
    %s66 = sadd.s32 %s65, 1
    %s67 = scalar_select %p64, %s65, %s66
    %p70 = pneg %p64
    %p71 = scmp.eq.s32.totalorder %s8, 1
    %p72 = por %p70, %p71
    %p73 = scmp.ne.s32.totalorder %s65, %s68
    %p74 = scmp.eq.s32.totalorder %s8, 0
    %p75 = por %p73, %p74
    %p76 = scmp.ne.s32.totalorder %s65, %s68
    %p77 = scmp.eq.s32.totalorder %s13, 1
    %p78 = por %p76, %p77
    %p79 = scmp.ne.s32.totalorder %s68, %s69
    %p80 = scmp.eq.s32.totalorder %s13, 0
    %p81 = por %p79, %p80
    %p82 = scmp.ne.s32.totalorder %s68, %s69
    %p83 = scmp.eq.s32.totalorder %s14, 1
    %p84 = por %p82, %p83
    %p86 = scmp.ne.s32.totalorder %s69, %s85
    %p87 = scmp.eq.s32.totalorder %s14, 0
    %p88 = por %p86, %p87
    %p89 = scmp.le.s32.totalorder 1, %s8
    %p90 = scmp.lt.s32.totalorder %s8, 3
    %p91 = pnand %p89, %p90
    %p92 = pneg %p91
    // Predicated region
    $region9: #{tpu_custom_call.1} parent=5 // pred_check
      _
    $region10: #{tpu_custom_call.1} parent=5 // pred_check_branch
      %94 = sbr.rel (%p91) target = $region12
    $region11: #{tpu_custom_call.1} parent=5 // pred_region
      %s95 = ssub.s32 %s8, 1
      // Predicated region
      $region13: #{tpu_custom_call.1} parent=11 // pred_check
        %p96 = pneg %p29
      $region14: #{tpu_custom_call.1} parent=11 // pred_check_branch
        %98 = sbr.rel (%p96) target = $region16
      $region15: #{tpu_custom_call.1} parent=11 // pred_region
        _
      $region16: #{tpu_custom_call.1} parent=11 // pred_fallthru
        _
    $region12: #{tpu_custom_call.1} parent=5 // pred_fallthru
      _
    %p99 = scmp.lt.s32.totalorder %s8, 2
    // Predicated region
    $region17: #{tpu_custom_call.1} parent=5 // pred_check
      %p100 = pneg %p99
    $region18: #{tpu_custom_call.1} parent=5 // pred_check_branch
      %102 = sbr.rel (%p100) target = $region20
    $region19: #{tpu_custom_call.1} parent=5 // pred_region
      // Predicated region
      $region21: #{tpu_custom_call.1} parent=19 // pred_check
        %p103 = pneg %p49
      $region22: #{tpu_custom_call.1} parent=19 // pred_check_branch
        %105 = sbr.rel (%p103) target = $region24
      $region23: #{tpu_custom_call.1} parent=19 // pred_region
        %s106 = smul.u32 66, %s8
        %p107 = scmp.lt.s32.totalorder %s106, 131
        %s108 = scalar_select %p107, %s106, 131
        %s109 = smul.addr %s108, 2
        %s110 = smul.addr %s109, 8
        %s111 = scalar_lea.vmem %s1, %s110
        %s112 = smul.u32 66, %s8
      $region24: #{tpu_custom_call.1} parent=19 // pred_fallthru
        _
    $region20: #{tpu_custom_call.1} parent=5 // pred_fallthru
      _
    %p113 = scmp.le.s32.totalorder 1, %s8
    %p114 = scmp.lt.s32.totalorder %s8, 3
    %p115 = pnand %p113, %p114
    %p116 = pneg %p115
    // Predicated region
    $region25: #{tpu_custom_call.1} parent=5 // pred_check
      _
    $region26: #{tpu_custom_call.1} parent=5 // pred_check_branch
      %118 = sbr.rel (%p115) target = $region28
    $region27: #{tpu_custom_call.1} parent=5 // pred_region
      %s119 = ssub.s32 %s8, 1
      %p120 = pneg %p29
      %p121 = pneg %p26
      %s122 = smul.u32 66, %s13
      %p123 = scmp.lt.s32.totalorder %s122, 131
      %s124 = scalar_select %p123, %s122, 131
      %s125 = smul.addr %s124, 2
      %s126 = smul.addr %s125, 8
      %s127 = scalar_lea.vmem %s1, %s126
      %p128 = pneg %p55
      %p129 = pneg %p52
      %p130 = pneg %p81
      %p131 = pneg %p78
      %s132 = smul.u32 66, %s13
      %p133 = scmp.lt.s32.totalorder %s132, 131
      %s134 = scalar_select %p133, %s132, 131
      %s135 = smul.addr %s134, 2
      %s136 = smul.addr %s135, 8
      %s137 = scalar_lea.vmem %s2, %s136
      %s138 = smul.u32 66, %s13
      %p139 = scmp.lt.s32.totalorder %s138, 131
      %s140 = scalar_select %p139, %s138, 131
      %s141 = smul.addr %s140, 2
      %s142 = smul.addr %s141, 8
      %s143 = scalar_lea.vmem %s1, %s142
      %s144 = smul.u32 66, %s13
      %s145 = smul.u32 66, %s13
      %p146 = scmp.lt.s32.totalorder %s145, 131
      %s147 = scalar_select %p146, %s145, 131
      %s148 = smul.addr %s147, 2
      %s149 = smul.addr %s148, 8
      %s150 = scalar_lea.vmem %s2, %s149
      %s151 = smul.u32 66, %s13
      %s152 = smul.u32 %s13, 528
      %s153 = scalar_lea.vmem %s0, %s152
      %v154 = vld [vmem:[%s153] sm:$0xff]
      %v155 = vld [vmem:[%s153 + $0x8] sm:$0xff]
      %v156 = vld [vmem:[%s153 + $0x10] sm:$0xff]
      %v157 = vld [vmem:[%s153 + $0x18] sm:$0xff]
      %v158 = vld [vmem:[%s153 + $0x20] sm:$0xff]
      %v159 = vld [vmem:[%s153 + $0x28] sm:$0xff]
      %v160 = vld [vmem:[%s153 + $0x30] sm:$0xff]
      %v161 = vld [vmem:[%s153 + $0x38] sm:$0xff]
      %v162 = vld [vmem:[%s153 + $0x40] sm:$0xff]
      %v163 = vld [vmem:[%s153 + $0x48] sm:$0xff]
      %v164 = vld [vmem:[%s153 + $0x50] sm:$0xff]
      %v165 = vld [vmem:[%s153 + $0x58] sm:$0xff]
      %v166 = vld [vmem:[%s153 + $0x60] sm:$0xff]
      %v167 = vld [vmem:[%s153 + $0x68] sm:$0xff]
      %v168 = vld [vmem:[%s153 + $0x70] sm:$0xff]
      %v169 = vld [vmem:[%s153 + $0x78] sm:$0xff]
      %v170 = vld [vmem:[%s153 + $0x80] sm:$0xff]
      %v171 = vld [vmem:[%s153 + $0x88] sm:$0xff]
      %v172 = vld [vmem:[%s153 + $0x90] sm:$0xff]
      %v173 = vld [vmem:[%s153 + $0x98] sm:$0xff]
      %v174 = vld [vmem:[%s153 + $0xa0] sm:$0xff]
      %v175 = vld [vmem:[%s153 + $0xa8] sm:$0xff]
      %v176 = vld [vmem:[%s153 + $0xb0] sm:$0xff]
      %v177 = vld [vmem:[%s153 + $0xb8] sm:$0xff]
      %v178 = vld [vmem:[%s153 + $0xc0] sm:$0xff]
      %v179 = vld [vmem:[%s153 + $0xc8] sm:$0xff]
      %v180 = vld [vmem:[%s153 + $0xd0] sm:$0xff]
      %v181 = vld [vmem:[%s153 + $0xd8] sm:$0xff]
      %v182 = vld [vmem:[%s153 + $0xe0] sm:$0xff]
      %v183 = vld [vmem:[%s153 + $0xe8] sm:$0xff]
      %v184 = vld [vmem:[%s153 + $0xf0] sm:$0xff]
      %v185 = vld [vmem:[%s153 + $0xf8] sm:$0xff]
      %v186 = vld [vmem:[%s153 + $0x100] sm:$0xff]
      %v187 = vld [vmem:[%s153 + $0x108] sm:$0xff]
      %v188 = vld [vmem:[%s153 + $0x110] sm:$0xff]
      %v189 = vld [vmem:[%s153 + $0x118] sm:$0xff]
      %v190 = vld [vmem:[%s153 + $0x120] sm:$0xff]
      %v191 = vld [vmem:[%s153 + $0x128] sm:$0xff]
      %v192 = vld [vmem:[%s153 + $0x130] sm:$0xff]
      %v193 = vld [vmem:[%s153 + $0x138] sm:$0xff]
      %v194 = vld [vmem:[%s153 + $0x140] sm:$0xff]
      %v195 = vld [vmem:[%s153 + $0x148] sm:$0xff]
      %v196 = vld [vmem:[%s153 + $0x150] sm:$0xff]
      %v197 = vld [vmem:[%s153 + $0x158] sm:$0xff]
      %v198 = vld [vmem:[%s153 + $0x160] sm:$0xff]
      %v199 = vld [vmem:[%s153 + $0x168] sm:$0xff]
      %v200 = vld [vmem:[%s153 + $0x170] sm:$0xff]
      %v201 = vld [vmem:[%s153 + $0x178] sm:$0xff]
      %v202 = vld [vmem:[%s153 + $0x180] sm:$0xff]
      %v203 = vld [vmem:[%s153 + $0x188] sm:$0xff]
      %v204 = vld [vmem:[%s153 + $0x190] sm:$0xff]
      %v205 = vld [vmem:[%s153 + $0x198] sm:$0xff]
      %v206 = vld [vmem:[%s153 + $0x1a0] sm:$0xff]
      %v207 = vld [vmem:[%s153 + $0x1a8] sm:$0xff]
      %v208 = vld [vmem:[%s153 + $0x1b0] sm:$0xff]
      %v209 = vld [vmem:[%s153 + $0x1b8] sm:$0xff]
      %v210 = vld [vmem:[%s153 + $0x1c0] sm:$0xff]
      %v211 = vld [vmem:[%s153 + $0x1c8] sm:$0xff]
      %v212 = vld [vmem:[%s153 + $0x1d0] sm:$0xff]
      %v213 = vld [vmem:[%s153 + $0x1d8] sm:$0xff]
      %v214 = vld [vmem:[%s153 + $0x1e0] sm:$0xff]
      %v215 = vld [vmem:[%s153 + $0x1e8] sm:$0xff]
      %v216 = vld [vmem:[%s153 + $0x1f0] sm:$0xff]
      %v217 = vld [vmem:[%s153 + $0x1f8] sm:$0xff]
      %v218 = vld [vmem:[%s153 + $0x200] sm:$0xff]
      %v219 = vld [vmem:[%s153 + $0x208] sm:$0xff]
      %v220 = vxor.u32 %v154, 2147483648
      %v221 = vxor.u32 %v155, 2147483648
      %v222 = vxor.u32 %v156, 2147483648
      %v223 = vxor.u32 %v157, 2147483648
      %v224 = vxor.u32 %v158, 2147483648
      %v225 = vxor.u32 %v159, 2147483648
      %v226 = vxor.u32 %v160, 2147483648
      %v227 = vxor.u32 %v161, 2147483648
      %v228 = vxor.u32 %v162, 2147483648
      %v229 = vxor.u32 %v163, 2147483648
      %v230 = vxor.u32 %v164, 2147483648
      %v231 = vxor.u32 %v165, 2147483648
      %v232 = vxor.u32 %v166, 2147483648
      %v233 = vxor.u32 %v167, 2147483648
      %v234 = vxor.u32 %v168, 2147483648
      %v235 = vxor.u32 %v169, 2147483648
      %v236 = vxor.u32 %v170, 2147483648
      %v237 = vxor.u32 %v171, 2147483648
      %v238 = vxor.u32 %v172, 2147483648
      %v239 = vxor.u32 %v173, 2147483648
      %v240 = vxor.u32 %v174, 2147483648
      %v241 = vxor.u32 %v175, 2147483648
      %v242 = vxor.u32 %v176, 2147483648
      %v243 = vxor.u32 %v177, 2147483648
      %v244 = vxor.u32 %v178, 2147483648
      %v245 = vxor.u32 %v179, 2147483648
      %v246 = vxor.u32 %v180, 2147483648
      %v247 = vxor.u32 %v181, 2147483648
      %v248 = vxor.u32 %v182, 2147483648
      %v249 = vxor.u32 %v183, 2147483648
      %v250 = vxor.u32 %v184, 2147483648
      %v251 = vxor.u32 %v185, 2147483648
      %v252 = vxor.u32 %v186, 2147483648
      %v253 = vxor.u32 %v187, 2147483648
      %v254 = vxor.u32 %v188, 2147483648
      %v255 = vxor.u32 %v189, 2147483648
      %v256 = vxor.u32 %v190, 2147483648
      %v257 = vxor.u32 %v191, 2147483648
      %v258 = vxor.u32 %v192, 2147483648
      %v259 = vxor.u32 %v193, 2147483648
      %v260 = vxor.u32 %v194, 2147483648
      %v261 = vxor.u32 %v195, 2147483648
      %v262 = vxor.u32 %v196, 2147483648
      %v263 = vxor.u32 %v197, 2147483648
      %v264 = vxor.u32 %v198, 2147483648
      %v265 = vxor.u32 %v199, 2147483648
      %v266 = vxor.u32 %v200, 2147483648
      %v267 = vxor.u32 %v201, 2147483648
      %v268 = vxor.u32 %v202, 2147483648
      %v269 = vxor.u32 %v203, 2147483648
      %v270 = vxor.u32 %v204, 2147483648
      %v271 = vxor.u32 %v205, 2147483648
      %v272 = vxor.u32 %v206, 2147483648
      %v273 = vxor.u32 %v207, 2147483648
      %v274 = vxor.u32 %v208, 2147483648
      %v275 = vxor.u32 %v209, 2147483648
      %v276 = vxor.u32 %v210, 2147483648
      %v277 = vxor.u32 %v211, 2147483648
      %v278 = vxor.u32 %v212, 2147483648
      %v279 = vxor.u32 %v213, 2147483648
      %v280 = vxor.u32 %v214, 2147483648
      %v281 = vxor.u32 %v215, 2147483648
      %v282 = vxor.u32 %v216, 2147483648
      %v283 = vxor.u32 %v217, 2147483648
      %v284 = vxor.u32 %v218, 2147483648
      %v285 = vxor.u32 %v219, 2147483648
      %v286 = vmul.f32 %v220, 1.442695
      %v287 = vpow.pop %v286
      %v288 = vmul.f32 %v221, 1.442695
      %v289 = vpow.pop %v288
      %v290 = vmul.f32 %v222, 1.442695
      %v291 = vpow.pop %v290
      %v292 = vmul.f32 %v223, 1.442695
      %v293 = vpow.pop %v292
      %v294 = vmul.f32 %v224, 1.442695
      %v295 = vpow.pop %v294
      %v296 = vmul.f32 %v225, 1.442695
      %v297 = vpow.pop %v296
      %v298 = vmul.f32 %v226, 1.442695
      %v299 = vpow.pop %v298
      %v300 = vmul.f32 %v227, 1.442695
      %v301 = vpow.pop %v300
      %v302 = vmul.f32 %v228, 1.442695
      %v303 = vpow.pop %v302
      %v304 = vmul.f32 %v229, 1.442695
      %v305 = vpow.pop %v304
      %v306 = vmul.f32 %v230, 1.442695
      %v307 = vpow.pop %v306
      %v308 = vmul.f32 %v231, 1.442695
      %v309 = vpow.pop %v308
      %v310 = vmul.f32 %v232, 1.442695
      %v311 = vpow.pop %v310
      %v312 = vmul.f32 %v233, 1.442695
      %v313 = vpow.pop %v312
      %v314 = vmul.f32 %v234, 1.442695
      %v315 = vpow.pop %v314
      %v316 = vmul.f32 %v235, 1.442695
      %v317 = vpow.pop %v316
      %v318 = vmul.f32 %v236, 1.442695
      %v319 = vpow.pop %v318
      %v320 = vmul.f32 %v237, 1.442695
      %v321 = vpow.pop %v320
      %v322 = vmul.f32 %v238, 1.442695
      %v323 = vpow.pop %v322
      %v324 = vmul.f32 %v239, 1.442695
      %v325 = vpow.pop %v324
      %v326 = vmul.f32 %v240, 1.442695
      %v327 = vpow.pop %v326
      %v328 = vmul.f32 %v241, 1.442695
      %v329 = vpow.pop %v328
      %v330 = vmul.f32 %v242, 1.442695
      %v331 = vpow.pop %v330
      %v332 = vmul.f32 %v243, 1.442695
      %v333 = vpow.pop %v332
      %v334 = vmul.f32 %v244, 1.442695
      %v335 = vpow.pop %v334
      %v336 = vmul.f32 %v245, 1.442695
      %v337 = vpow.pop %v336
      %v338 = vmul.f32 %v246, 1.442695
      %v339 = vpow.pop %v338
      %v340 = vmul.f32 %v247, 1.442695
      %v341 = vpow.pop %v340
      %v342 = vmul.f32 %v248, 1.442695
      %v343 = vpow.pop %v342
      %v344 = vmul.f32 %v249, 1.442695
      %v345 = vpow.pop %v344
      %v346 = vmul.f32 %v250, 1.442695
      %v347 = vpow.pop %v346
      %v348 = vmul.f32 %v251, 1.442695
      %v349 = vpow.pop %v348
      %v350 = vmul.f32 %v252, 1.442695
      %v351 = vpow.pop %v350
      %v352 = vmul.f32 %v253, 1.442695
      %v353 = vpow.pop %v352
      %v354 = vmul.f32 %v254, 1.442695
      %v355 = vpow.pop %v354
      %v356 = vmul.f32 %v255, 1.442695
      %v357 = vpow.pop %v356
      %v358 = vmul.f32 %v256, 1.442695
      %v359 = vpow.pop %v358
      %v360 = vmul.f32 %v257, 1.442695
      %v361 = vpow.pop %v360
      %v362 = vmul.f32 %v258, 1.442695
      %v363 = vpow.pop %v362
      %v364 = vmul.f32 %v259, 1.442695
      %v365 = vpow.pop %v364
      %v366 = vmul.f32 %v260, 1.442695
      %v367 = vpow.pop %v366
      %v368 = vmul.f32 %v261, 1.442695
      %v369 = vpow.pop %v368
      %v370 = vmul.f32 %v262, 1.442695
      %v371 = vpow.pop %v370
      %v372 = vmul.f32 %v263, 1.442695
      %v373 = vpow.pop %v372
      %v374 = vmul.f32 %v264, 1.442695
      %v375 = vpow.pop %v374
      %v376 = vmul.f32 %v265, 1.442695
      %v377 = vpow.pop %v376
      %v378 = vmul.f32 %v266, 1.442695
      %v379 = vpow.pop %v378
      %v380 = vmul.f32 %v267, 1.442695
      %v381 = vpow.pop %v380
      %v382 = vmul.f32 %v268, 1.442695
      %v383 = vpow.pop %v382
      %v384 = vmul.f32 %v269, 1.442695
      %v385 = vpow.pop %v384
      %v386 = vmul.f32 %v270, 1.442695
      %v387 = vpow.pop %v386
      %v388 = vmul.f32 %v271, 1.442695
      %v389 = vpow.pop %v388
      %v390 = vmul.f32 %v272, 1.442695
      %v391 = vpow.pop %v390
      %v392 = vmul.f32 %v273, 1.442695
      %v393 = vpow.pop %v392
      %v394 = vmul.f32 %v274, 1.442695
      %v395 = vpow.pop %v394
      %v396 = vmul.f32 %v275, 1.442695
      %v397 = vpow.pop %v396
      %v398 = vmul.f32 %v276, 1.442695
      %v399 = vpow.pop %v398
      %v400 = vmul.f32 %v277, 1.442695
      %v401 = vpow.pop %v400
      %v402 = vmul.f32 %v278, 1.442695
      %v403 = vpow.pop %v402
      %v404 = vmul.f32 %v279, 1.442695
      %v405 = vpow.pop %v404
      %v406 = vmul.f32 %v280, 1.442695
      %v407 = vpow.pop %v406
      %v408 = vmul.f32 %v281, 1.442695
      %v409 = vpow.pop %v408
      %v410 = vmul.f32 %v282, 1.442695
      %v411 = vpow.pop %v410
      %v412 = vmul.f32 %v283, 1.442695
      %v413 = vpow.pop %v412
      %v414 = vmul.f32 %v284, 1.442695
      %v415 = vpow.pop %v414
      %v416 = vmul.f32 %v285, 1.442695
      %v417 = vpow.pop %v416
      %v418 = vadd.f32 %v287, 1.0
      %v419 = vadd.f32 %v289, 1.0
      %v420 = vadd.f32 %v291, 1.0
      %v421 = vadd.f32 %v293, 1.0
      %v422 = vadd.f32 %v295, 1.0
      %v423 = vadd.f32 %v297, 1.0
      %v424 = vadd.f32 %v299, 1.0
      %v425 = vadd.f32 %v301, 1.0
      %v426 = vadd.f32 %v303, 1.0
      %v427 = vadd.f32 %v305, 1.0
      %v428 = vadd.f32 %v307, 1.0
      %v429 = vadd.f32 %v309, 1.0
      %v430 = vadd.f32 %v311, 1.0
      %v431 = vadd.f32 %v313, 1.0
      %v432 = vadd.f32 %v315, 1.0
      %v433 = vadd.f32 %v317, 1.0
      %v434 = vadd.f32 %v319, 1.0
      %v435 = vadd.f32 %v321, 1.0
      %v436 = vadd.f32 %v323, 1.0
      %v437 = vadd.f32 %v325, 1.0
      %v438 = vadd.f32 %v327, 1.0
      %v439 = vadd.f32 %v329, 1.0
      %v440 = vadd.f32 %v331, 1.0
      %v441 = vadd.f32 %v333, 1.0
      %v442 = vadd.f32 %v335, 1.0
      %v443 = vadd.f32 %v337, 1.0
      %v444 = vadd.f32 %v339, 1.0
      %v445 = vadd.f32 %v341, 1.0
      %v446 = vadd.f32 %v343, 1.0
      %v447 = vadd.f32 %v345, 1.0
      %v448 = vadd.f32 %v347, 1.0
      %v449 = vadd.f32 %v349, 1.0
      %v450 = vadd.f32 %v351, 1.0
      %v451 = vadd.f32 %v353, 1.0
      %v452 = vadd.f32 %v355, 1.0
      %v453 = vadd.f32 %v357, 1.0
      %v454 = vadd.f32 %v359, 1.0
      %v455 = vadd.f32 %v361, 1.0
      %v456 = vadd.f32 %v363, 1.0
      %v457 = vadd.f32 %v365, 1.0
      %v458 = vadd.f32 %v367, 1.0
      %v459 = vadd.f32 %v369, 1.0
      %v460 = vadd.f32 %v371, 1.0
      %v461 = vadd.f32 %v373, 1.0
      %v462 = vadd.f32 %v375, 1.0
      %v463 = vadd.f32 %v377, 1.0
      %v464 = vadd.f32 %v379, 1.0
      %v465 = vadd.f32 %v381, 1.0
      %v466 = vadd.f32 %v383, 1.0
      %v467 = vadd.f32 %v385, 1.0
      %v468 = vadd.f32 %v387, 1.0
      %v469 = vadd.f32 %v389, 1.0
      %v470 = vadd.f32 %v391, 1.0
      %v471 = vadd.f32 %v393, 1.0
      %v472 = vadd.f32 %v395, 1.0
      %v473 = vadd.f32 %v397, 1.0
      %v474 = vadd.f32 %v399, 1.0
      %v475 = vadd.f32 %v401, 1.0
      %v476 = vadd.f32 %v403, 1.0
      %v477 = vadd.f32 %v405, 1.0
      %v478 = vadd.f32 %v407, 1.0
      %v479 = vadd.f32 %v409, 1.0
      %v480 = vadd.f32 %v411, 1.0
      %v481 = vadd.f32 %v413, 1.0
      %v482 = vadd.f32 %v415, 1.0
      %v483 = vadd.f32 %v417, 1.0
      %v484 = vrcp.pop %v418
      %v485 = vmul.f32 1.0, %v484
      %v486 = vrcp.pop %v419
      %v487 = vmul.f32 1.0, %v486
      %v488 = vrcp.pop %v420
      %v489 = vmul.f32 1.0, %v488
      %v490 = vrcp.pop %v421
      %v491 = vmul.f32 1.0, %v490
      %v492 = vrcp.pop %v422
      %v493 = vmul.f32 1.0, %v492
      %v494 = vrcp.pop %v423
      %v495 = vmul.f32 1.0, %v494
      %v496 = vrcp.pop %v424
      %v497 = vmul.f32 1.0, %v496
      %v498 = vrcp.pop %v425
      %v499 = vmul.f32 1.0, %v498
      %v500 = vrcp.pop %v426
      %v501 = vmul.f32 1.0, %v500
      %v502 = vrcp.pop %v427
      %v503 = vmul.f32 1.0, %v502
      %v504 = vrcp.pop %v428
      %v505 = vmul.f32 1.0, %v504
      %v506 = vrcp.pop %v429
      %v507 = vmul.f32 1.0, %v506
      %v508 = vrcp.pop %v430
      %v509 = vmul.f32 1.0, %v508
      %v510 = vrcp.pop %v431
      %v511 = vmul.f32 1.0, %v510
      %v512 = vrcp.pop %v432
      %v513 = vmul.f32 1.0, %v512
      %v514 = vrcp.pop %v433
      %v515 = vmul.f32 1.0, %v514
      %v516 = vrcp.pop %v434
      %v517 = vmul.f32 1.0, %v516
      %v518 = vrcp.pop %v435
      %v519 = vmul.f32 1.0, %v518
      %v520 = vrcp.pop %v436
      %v521 = vmul.f32 1.0, %v520
      %v522 = vrcp.pop %v437
      %v523 = vmul.f32 1.0, %v522
      %v524 = vrcp.pop %v438
      %v525 = vmul.f32 1.0, %v524
      %v526 = vrcp.pop %v439
      %v527 = vmul.f32 1.0, %v526
      %v528 = vrcp.pop %v440
      %v529 = vmul.f32 1.0, %v528
      %v530 = vrcp.pop %v441
      %v531 = vmul.f32 1.0, %v530
      %v532 = vrcp.pop %v442
      %v533 = vmul.f32 1.0, %v532
      %v534 = vrcp.pop %v443
      %v535 = vmul.f32 1.0, %v534
      %v536 = vrcp.pop %v444
      %v537 = vmul.f32 1.0, %v536
      %v538 = vrcp.pop %v445
      %v539 = vmul.f32 1.0, %v538
      %v540 = vrcp.pop %v446
      %v541 = vmul.f32 1.0, %v540
      %v542 = vrcp.pop %v447
      %v543 = vmul.f32 1.0, %v542
      %v544 = vrcp.pop %v448
      %v545 = vmul.f32 1.0, %v544
      %v546 = vrcp.pop %v449
      %v547 = vmul.f32 1.0, %v546
      %v548 = vrcp.pop %v450
      %v549 = vmul.f32 1.0, %v548
      %v550 = vrcp.pop %v451
      %v551 = vmul.f32 1.0, %v550
      %v552 = vrcp.pop %v452
      %v553 = vmul.f32 1.0, %v552
      %v554 = vrcp.pop %v453
      %v555 = vmul.f32 1.0, %v554
      %v556 = vrcp.pop %v454
      %v557 = vmul.f32 1.0, %v556
      %v558 = vrcp.pop %v455
      %v559 = vmul.f32 1.0, %v558
      %v560 = vrcp.pop %v456
      %v561 = vmul.f32 1.0, %v560
      %v562 = vrcp.pop %v457
      %v563 = vmul.f32 1.0, %v562
      %v564 = vrcp.pop %v458
      %v565 = vmul.f32 1.0, %v564
      %v566 = vrcp.pop %v459
      %v567 = vmul.f32 1.0, %v566
      %v568 = vrcp.pop %v460
      %v569 = vmul.f32 1.0, %v568
      %v570 = vrcp.pop %v461
      %v571 = vmul.f32 1.0, %v570
      %v572 = vrcp.pop %v462
      %v573 = vmul.f32 1.0, %v572
      %v574 = vrcp.pop %v463
      %v575 = vmul.f32 1.0, %v574
      %v576 = vrcp.pop %v464
      %v577 = vmul.f32 1.0, %v576
      %v578 = vrcp.pop %v465
      %v579 = vmul.f32 1.0, %v578
      %v580 = vrcp.pop %v466
      %v581 = vmul.f32 1.0, %v580
      %v582 = vrcp.pop %v467
      %v583 = vmul.f32 1.0, %v582
      %v584 = vrcp.pop %v468
      %v585 = vmul.f32 1.0, %v584
      %v586 = vrcp.pop %v469
      %v587 = vmul.f32 1.0, %v586
      %v588 = vrcp.pop %v470
      %v589 = vmul.f32 1.0, %v588
      %v590 = vrcp.pop %v471
      %v591 = vmul.f32 1.0, %v590
      %v592 = vrcp.pop %v472
      %v593 = vmul.f32 1.0, %v592
      %v594 = vrcp.pop %v473
      %v595 = vmul.f32 1.0, %v594
      %v596 = vrcp.pop %v474
      %v597 = vmul.f32 1.0, %v596
      %v598 = vrcp.pop %v475
      %v599 = vmul.f32 1.0, %v598
      %v600 = vrcp.pop %v476
      %v601 = vmul.f32 1.0, %v600
      %v602 = vrcp.pop %v477
      %v603 = vmul.f32 1.0, %v602
      %v604 = vrcp.pop %v478
      %v605 = vmul.f32 1.0, %v604
      %v606 = vrcp.pop %v479
      %v607 = vmul.f32 1.0, %v606
      %v608 = vrcp.pop %v480
      %v609 = vmul.f32 1.0, %v608
      %v610 = vrcp.pop %v481
      %v611 = vmul.f32 1.0, %v610
      %v612 = vrcp.pop %v482
      %v613 = vmul.f32 1.0, %v612
      %v614 = vrcp.pop %v483
      %v615 = vmul.f32 1.0, %v614
      %v616 = vld [vmem:[%s143] sm:$0xff]
      %v617 = vld [vmem:[%s143 + $0x8] sm:$0xff]
      %v618 = vld [vmem:[%s143 + $0x10] sm:$0xff]
      %v619 = vld [vmem:[%s143 + $0x18] sm:$0xff]
      %v620 = vld [vmem:[%s143 + $0x20] sm:$0xff]
      %v621 = vld [vmem:[%s143 + $0x28] sm:$0xff]
      %v622 = vld [vmem:[%s143 + $0x30] sm:$0xff]
      %v623 = vld [vmem:[%s143 + $0x38] sm:$0xff]
      %v624 = vld [vmem:[%s143 + $0x40] sm:$0xff]
      %v625 = vld [vmem:[%s143 + $0x48] sm:$0xff]
      %v626 = vld [vmem:[%s143 + $0x50] sm:$0xff]
      %v627 = vld [vmem:[%s143 + $0x58] sm:$0xff]
      %v628 = vld [vmem:[%s143 + $0x60] sm:$0xff]
      %v629 = vld [vmem:[%s143 + $0x68] sm:$0xff]
      %v630 = vld [vmem:[%s143 + $0x70] sm:$0xff]
      %v631 = vld [vmem:[%s143 + $0x78] sm:$0xff]
      %v632 = vld [vmem:[%s143 + $0x80] sm:$0xff]
      %v633 = vld [vmem:[%s143 + $0x88] sm:$0xff]
      %v634 = vld [vmem:[%s143 + $0x90] sm:$0xff]
      %v635 = vld [vmem:[%s143 + $0x98] sm:$0xff]
      %v636 = vld [vmem:[%s143 + $0xa0] sm:$0xff]
      %v637 = vld [vmem:[%s143 + $0xa8] sm:$0xff]
      %v638 = vld [vmem:[%s143 + $0xb0] sm:$0xff]
      %v639 = vld [vmem:[%s143 + $0xb8] sm:$0xff]
      %v640 = vld [vmem:[%s143 + $0xc0] sm:$0xff]
      %v641 = vld [vmem:[%s143 + $0xc8] sm:$0xff]
      %v642 = vld [vmem:[%s143 + $0xd0] sm:$0xff]
      %v643 = vld [vmem:[%s143 + $0xd8] sm:$0xff]
      %v644 = vld [vmem:[%s143 + $0xe0] sm:$0xff]
      %v645 = vld [vmem:[%s143 + $0xe8] sm:$0xff]
      %v646 = vld [vmem:[%s143 + $0xf0] sm:$0xff]
      %v647 = vld [vmem:[%s143 + $0xf8] sm:$0xff]
      %v648 = vld [vmem:[%s143 + $0x100] sm:$0xff]
      %v649 = vld [vmem:[%s143 + $0x108] sm:$0xff]
      %v650 = vld [vmem:[%s143 + $0x110] sm:$0xff]
      %v651 = vld [vmem:[%s143 + $0x118] sm:$0xff]
      %v652 = vld [vmem:[%s143 + $0x120] sm:$0xff]
      %v653 = vld [vmem:[%s143 + $0x128] sm:$0xff]
      %v654 = vld [vmem:[%s143 + $0x130] sm:$0xff]
      %v655 = vld [vmem:[%s143 + $0x138] sm:$0xff]
      %v656 = vld [vmem:[%s143 + $0x140] sm:$0xff]
      %v657 = vld [vmem:[%s143 + $0x148] sm:$0xff]
      %v658 = vld [vmem:[%s143 + $0x150] sm:$0xff]
      %v659 = vld [vmem:[%s143 + $0x158] sm:$0xff]
      %v660 = vld [vmem:[%s143 + $0x160] sm:$0xff]
      %v661 = vld [vmem:[%s143 + $0x168] sm:$0xff]
      %v662 = vld [vmem:[%s143 + $0x170] sm:$0xff]
      %v663 = vld [vmem:[%s143 + $0x178] sm:$0xff]
      %v664 = vld [vmem:[%s143 + $0x180] sm:$0xff]
      %v665 = vld [vmem:[%s143 + $0x188] sm:$0xff]
      %v666 = vld [vmem:[%s143 + $0x190] sm:$0xff]
      %v667 = vld [vmem:[%s143 + $0x198] sm:$0xff]
      %v668 = vld [vmem:[%s143 + $0x1a0] sm:$0xff]
      %v669 = vld [vmem:[%s143 + $0x1a8] sm:$0xff]
      %v670 = vld [vmem:[%s143 + $0x1b0] sm:$0xff]
      %v671 = vld [vmem:[%s143 + $0x1b8] sm:$0xff]
      %v672 = vld [vmem:[%s143 + $0x1c0] sm:$0xff]
      %v673 = vld [vmem:[%s143 + $0x1c8] sm:$0xff]
      %v674 = vld [vmem:[%s143 + $0x1d0] sm:$0xff]
      %v675 = vld [vmem:[%s143 + $0x1d8] sm:$0xff]
      %v676 = vld [vmem:[%s143 + $0x1e0] sm:$0xff]
      %v677 = vld [vmem:[%s143 + $0x1e8] sm:$0xff]
      %v678 = vld [vmem:[%s143 + $0x1f0] sm:$0xff]
      %v679 = vld [vmem:[%s143 + $0x1f8] sm:$0xff]
      %v680 = vld [vmem:[%s143 + $0x200] sm:$0xff]
      %v681 = vld [vmem:[%s143 + $0x208] sm:$0xff]
      %v682 = vld [vmem:[%s143 + $0x210] sm:$0xff]
      %v683 = vld [vmem:[%s143 + $0x218] sm:$0xff]
      %v684 = vld [vmem:[%s143 + $0x220] sm:$0xff]
      %v685 = vld [vmem:[%s143 + $0x228] sm:$0xff]
      %v686 = vld [vmem:[%s143 + $0x230] sm:$0xff]
      %v687 = vld [vmem:[%s143 + $0x238] sm:$0xff]
      %v688 = vld [vmem:[%s143 + $0x240] sm:$0xff]
      %v689 = vld [vmem:[%s143 + $0x248] sm:$0xff]
      %v690 = vld [vmem:[%s143 + $0x250] sm:$0xff]
      %v691 = vld [vmem:[%s143 + $0x258] sm:$0xff]
      %v692 = vld [vmem:[%s143 + $0x260] sm:$0xff]
      %v693 = vld [vmem:[%s143 + $0x268] sm:$0xff]
      %v694 = vld [vmem:[%s143 + $0x270] sm:$0xff]
      %v695 = vld [vmem:[%s143 + $0x278] sm:$0xff]
      %v696 = vld [vmem:[%s143 + $0x280] sm:$0xff]
      %v697 = vld [vmem:[%s143 + $0x288] sm:$0xff]
      %v698 = vld [vmem:[%s143 + $0x290] sm:$0xff]
      %v699 = vld [vmem:[%s143 + $0x298] sm:$0xff]
      %v700 = vld [vmem:[%s143 + $0x2a0] sm:$0xff]
      %v701 = vld [vmem:[%s143 + $0x2a8] sm:$0xff]
      %v702 = vld [vmem:[%s143 + $0x2b0] sm:$0xff]
      %v703 = vld [vmem:[%s143 + $0x2b8] sm:$0xff]
      %v704 = vld [vmem:[%s143 + $0x2c0] sm:$0xff]
      %v705 = vld [vmem:[%s143 + $0x2c8] sm:$0xff]
      %v706 = vld [vmem:[%s143 + $0x2d0] sm:$0xff]
      %v707 = vld [vmem:[%s143 + $0x2d8] sm:$0xff]
      %v708 = vld [vmem:[%s143 + $0x2e0] sm:$0xff]
      %v709 = vld [vmem:[%s143 + $0x2e8] sm:$0xff]
      %v710 = vld [vmem:[%s143 + $0x2f0] sm:$0xff]
      %v711 = vld [vmem:[%s143 + $0x2f8] sm:$0xff]
      %v712 = vld [vmem:[%s143 + $0x300] sm:$0xff]
      %v713 = vld [vmem:[%s143 + $0x308] sm:$0xff]
      %v714 = vld [vmem:[%s143 + $0x310] sm:$0xff]
      %v715 = vld [vmem:[%s143 + $0x318] sm:$0xff]
      %v716 = vld [vmem:[%s143 + $0x320] sm:$0xff]
      %v717 = vld [vmem:[%s143 + $0x328] sm:$0xff]
      %v718 = vld [vmem:[%s143 + $0x330] sm:$0xff]
      %v719 = vld [vmem:[%s143 + $0x338] sm:$0xff]
      %v720 = vld [vmem:[%s143 + $0x340] sm:$0xff]
      %v721 = vld [vmem:[%s143 + $0x348] sm:$0xff]
      %v722 = vld [vmem:[%s143 + $0x350] sm:$0xff]
      %v723 = vld [vmem:[%s143 + $0x358] sm:$0xff]
      %v724 = vld [vmem:[%s143 + $0x360] sm:$0xff]
      %v725 = vld [vmem:[%s143 + $0x368] sm:$0xff]
      %v726 = vld [vmem:[%s143 + $0x370] sm:$0xff]
      %v727 = vld [vmem:[%s143 + $0x378] sm:$0xff]
      %v728 = vld [vmem:[%s143 + $0x380] sm:$0xff]
      %v729 = vld [vmem:[%s143 + $0x388] sm:$0xff]
      %v730 = vld [vmem:[%s143 + $0x390] sm:$0xff]
      %v731 = vld [vmem:[%s143 + $0x398] sm:$0xff]
      %v732 = vld [vmem:[%s143 + $0x3a0] sm:$0xff]
      %v733 = vld [vmem:[%s143 + $0x3a8] sm:$0xff]
      %v734 = vld [vmem:[%s143 + $0x3b0] sm:$0xff]
      %v735 = vld [vmem:[%s143 + $0x3b8] sm:$0xff]
      %v736 = vld [vmem:[%s143 + $0x3c0] sm:$0xff]
      %v737 = vld [vmem:[%s143 + $0x3c8] sm:$0xff]
      %v738 = vld [vmem:[%s143 + $0x3d0] sm:$0xff]
      %v739 = vld [vmem:[%s143 + $0x3d8] sm:$0xff]
      %v740 = vld [vmem:[%s143 + $0x3e0] sm:$0xff]
      %v741 = vld [vmem:[%s143 + $0x3e8] sm:$0xff]
      %v742 = vld [vmem:[%s143 + $0x3f0] sm:$0xff]
      %v743 = vld [vmem:[%s143 + $0x3f8] sm:$0xff]
      %v744 = vld [vmem:[%s143 + $0x400] sm:$0xff]
      %v745 = vld [vmem:[%s143 + $0x408] sm:$0xff]
      %v746 = vld [vmem:[%s143 + $0x410] sm:$0xff]
      %v747 = vld [vmem:[%s143 + $0x418] sm:$0xff]
      %749 = vset.pattern.permute.xlu0 0
      %750 = vperm.xlu0 %749, %v485
      %v751 = vpop.permute.xlu0 %750
      %754 = vset.pattern.permute.xlu0 0
      %755 = vperm.xlu0 %754, %v487
      %v756 = vpop.permute.xlu0 %755
      %759 = vset.pattern.permute.xlu0 0
      %760 = vperm.xlu0 %759, %v489
      %v761 = vpop.permute.xlu0 %760
      %764 = vset.pattern.permute.xlu0 0
      %765 = vperm.xlu0 %764, %v491
      %v766 = vpop.permute.xlu0 %765
      %769 = vset.pattern.permute.xlu0 0
      %770 = vperm.xlu0 %769, %v493
      %v771 = vpop.permute.xlu0 %770
      %774 = vset.pattern.permute.xlu0 0
      %775 = vperm.xlu0 %774, %v495
      %v776 = vpop.permute.xlu0 %775
      %779 = vset.pattern.permute.xlu0 0
      %780 = vperm.xlu0 %779, %v497
      %v781 = vpop.permute.xlu0 %780
      %784 = vset.pattern.permute.xlu0 0
      %785 = vperm.xlu0 %784, %v499
      %v786 = vpop.permute.xlu0 %785
      %789 = vset.pattern.permute.xlu0 0
      %790 = vperm.xlu0 %789, %v501
      %v791 = vpop.permute.xlu0 %790
      %794 = vset.pattern.permute.xlu0 0
      %795 = vperm.xlu0 %794, %v503
      %v796 = vpop.permute.xlu0 %795
      %799 = vset.pattern.permute.xlu0 0
      %800 = vperm.xlu0 %799, %v505
      %v801 = vpop.permute.xlu0 %800
      %804 = vset.pattern.permute.xlu0 0
      %805 = vperm.xlu0 %804, %v507
      %v806 = vpop.permute.xlu0 %805
      %809 = vset.pattern.permute.xlu0 0
      %810 = vperm.xlu0 %809, %v509
      %v811 = vpop.permute.xlu0 %810
      %814 = vset.pattern.permute.xlu0 0
      %815 = vperm.xlu0 %814, %v511
      %v816 = vpop.permute.xlu0 %815
      %819 = vset.pattern.permute.xlu0 0
      %820 = vperm.xlu0 %819, %v513
      %v821 = vpop.permute.xlu0 %820
      %824 = vset.pattern.permute.xlu0 0
      %825 = vperm.xlu0 %824, %v515
      %v826 = vpop.permute.xlu0 %825
      %829 = vset.pattern.permute.xlu0 0
      %830 = vperm.xlu0 %829, %v517
      %v831 = vpop.permute.xlu0 %830
      %834 = vset.pattern.permute.xlu0 0
      %835 = vperm.xlu0 %834, %v519
      %v836 = vpop.permute.xlu0 %835
      %839 = vset.pattern.permute.xlu0 0
      %840 = vperm.xlu0 %839, %v521
      %v841 = vpop.permute.xlu0 %840
      %844 = vset.pattern.permute.xlu0 0
      %845 = vperm.xlu0 %844, %v523
      %v846 = vpop.permute.xlu0 %845
      %849 = vset.pattern.permute.xlu0 0
      %850 = vperm.xlu0 %849, %v525
      %v851 = vpop.permute.xlu0 %850
      %854 = vset.pattern.permute.xlu0 0
      %855 = vperm.xlu0 %854, %v527
      %v856 = vpop.permute.xlu0 %855
      %859 = vset.pattern.permute.xlu0 0
      %860 = vperm.xlu0 %859, %v529
      %v861 = vpop.permute.xlu0 %860
      %864 = vset.pattern.permute.xlu0 0
      %865 = vperm.xlu0 %864, %v531
      %v866 = vpop.permute.xlu0 %865
      %869 = vset.pattern.permute.xlu0 0
      %870 = vperm.xlu0 %869, %v533
      %v871 = vpop.permute.xlu0 %870
      %874 = vset.pattern.permute.xlu0 0
      %875 = vperm.xlu0 %874, %v535
      %v876 = vpop.permute.xlu0 %875
      %879 = vset.pattern.permute.xlu0 0
      %880 = vperm.xlu0 %879, %v537
      %v881 = vpop.permute.xlu0 %880
      %884 = vset.pattern.permute.xlu0 0
      %885 = vperm.xlu0 %884, %v539
      %v886 = vpop.permute.xlu0 %885
      %889 = vset.pattern.permute.xlu0 0
      %890 = vperm.xlu0 %889, %v541
      %v891 = vpop.permute.xlu0 %890
      %894 = vset.pattern.permute.xlu0 0
      %895 = vperm.xlu0 %894, %v543
      %v896 = vpop.permute.xlu0 %895
      %899 = vset.pattern.permute.xlu0 0
      %900 = vperm.xlu0 %899, %v545
      %v901 = vpop.permute.xlu0 %900
      %904 = vset.pattern.permute.xlu0 0
      %905 = vperm.xlu0 %904, %v547
      %v906 = vpop.permute.xlu0 %905
      %909 = vset.pattern.permute.xlu0 0
      %910 = vperm.xlu0 %909, %v549
      %v911 = vpop.permute.xlu0 %910
      %914 = vset.pattern.permute.xlu0 0
      %915 = vperm.xlu0 %914, %v551
      %v916 = vpop.permute.xlu0 %915
      %919 = vset.pattern.permute.xlu0 0
      %920 = vperm.xlu0 %919, %v553
      %v921 = vpop.permute.xlu0 %920
      %924 = vset.pattern.permute.xlu0 0
      %925 = vperm.xlu0 %924, %v555
      %v926 = vpop.permute.xlu0 %925
      %929 = vset.pattern.permute.xlu0 0
      %930 = vperm.xlu0 %929, %v557
      %v931 = vpop.permute.xlu0 %930
      %934 = vset.pattern.permute.xlu0 0
      %935 = vperm.xlu0 %934, %v559
      %v936 = vpop.permute.xlu0 %935
      %939 = vset.pattern.permute.xlu0 0
      %940 = vperm.xlu0 %939, %v561
      %v941 = vpop.permute.xlu0 %940
      %944 = vset.pattern.permute.xlu0 0
      %945 = vperm.xlu0 %944, %v563
      %v946 = vpop.permute.xlu0 %945
      %949 = vset.pattern.permute.xlu0 0
      %950 = vperm.xlu0 %949, %v565
      %v951 = vpop.permute.xlu0 %950
      %954 = vset.pattern.permute.xlu0 0
      %955 = vperm.xlu0 %954, %v567
      %v956 = vpop.permute.xlu0 %955
      %959 = vset.pattern.permute.xlu0 0
      %960 = vperm.xlu0 %959, %v569
      %v961 = vpop.permute.xlu0 %960
      %964 = vset.pattern.permute.xlu0 0
      %965 = vperm.xlu0 %964, %v571
      %v966 = vpop.permute.xlu0 %965
      %969 = vset.pattern.permute.xlu0 0
      %970 = vperm.xlu0 %969, %v573
      %v971 = vpop.permute.xlu0 %970
      %974 = vset.pattern.permute.xlu0 0
      %975 = vperm.xlu0 %974, %v575
      %v976 = vpop.permute.xlu0 %975
      %979 = vset.pattern.permute.xlu0 0
      %980 = vperm.xlu0 %979, %v577
      %v981 = vpop.permute.xlu0 %980
      %984 = vset.pattern.permute.xlu0 0
      %985 = vperm.xlu0 %984, %v579
      %v986 = vpop.permute.xlu0 %985
      %989 = vset.pattern.permute.xlu0 0
      %990 = vperm.xlu0 %989, %v581
      %v991 = vpop.permute.xlu0 %990
      %994 = vset.pattern.permute.xlu0 0
      %995 = vperm.xlu0 %994, %v583
      %v996 = vpop.permute.xlu0 %995
      %999 = vset.pattern.permute.xlu0 0
      %1000 = vperm.xlu0 %999, %v585
      %v1001 = vpop.permute.xlu0 %1000
      %1004 = vset.pattern.permute.xlu0 0
      %1005 = vperm.xlu0 %1004, %v587
      %v1006 = vpop.permute.xlu0 %1005
      %1009 = vset.pattern.permute.xlu0 0
      %1010 = vperm.xlu0 %1009, %v589
      %v1011 = vpop.permute.xlu0 %1010
      %1014 = vset.pattern.permute.xlu0 0
      %1015 = vperm.xlu0 %1014, %v591
      %v1016 = vpop.permute.xlu0 %1015
      %1019 = vset.pattern.permute.xlu0 0
      %1020 = vperm.xlu0 %1019, %v593
      %v1021 = vpop.permute.xlu0 %1020
      %1024 = vset.pattern.permute.xlu0 0
      %1025 = vperm.xlu0 %1024, %v595
      %v1026 = vpop.permute.xlu0 %1025
      %1029 = vset.pattern.permute.xlu0 0
      %1030 = vperm.xlu0 %1029, %v597
      %v1031 = vpop.permute.xlu0 %1030
      %1034 = vset.pattern.permute.xlu0 0
      %1035 = vperm.xlu0 %1034, %v599
      %v1036 = vpop.permute.xlu0 %1035
      %1039 = vset.pattern.permute.xlu0 0
      %1040 = vperm.xlu0 %1039, %v601
      %v1041 = vpop.permute.xlu0 %1040
      %1044 = vset.pattern.permute.xlu0 0
      %1045 = vperm.xlu0 %1044, %v603
      %v1046 = vpop.permute.xlu0 %1045
      %1049 = vset.pattern.permute.xlu0 0
      %1050 = vperm.xlu0 %1049, %v605
      %v1051 = vpop.permute.xlu0 %1050
      %1054 = vset.pattern.permute.xlu0 0
      %1055 = vperm.xlu0 %1054, %v607
      %v1056 = vpop.permute.xlu0 %1055
      %1059 = vset.pattern.permute.xlu0 0
      %1060 = vperm.xlu0 %1059, %v609
      %v1061 = vpop.permute.xlu0 %1060
      %1064 = vset.pattern.permute.xlu0 0
      %1065 = vperm.xlu0 %1064, %v611
      %v1066 = vpop.permute.xlu0 %1065
      %1069 = vset.pattern.permute.xlu0 0
      %1070 = vperm.xlu0 %1069, %v613
      %v1071 = vpop.permute.xlu0 %1070
      %1074 = vset.pattern.permute.xlu0 0
      %1075 = vperm.xlu0 %1074, %v615
      %v1076 = vpop.permute.xlu0 %1075
      %v1078 = vmul.f32 %v751, %v616
      %v1079 = vmul.f32 %v751, %v617
      %v1080 = vmul.f32 %v756, %v618
      %v1081 = vmul.f32 %v756, %v619
      %v1082 = vmul.f32 %v761, %v620
      %v1083 = vmul.f32 %v761, %v621
      %v1084 = vmul.f32 %v766, %v622
      %v1085 = vmul.f32 %v766, %v623
      %v1086 = vmul.f32 %v771, %v624
      %v1087 = vmul.f32 %v771, %v625
      %v1088 = vmul.f32 %v776, %v626
      %v1089 = vmul.f32 %v776, %v627
      %v1090 = vmul.f32 %v781, %v628
      %v1091 = vmul.f32 %v781, %v629
      %v1092 = vmul.f32 %v786, %v630
      %v1093 = vmul.f32 %v786, %v631
      %v1094 = vmul.f32 %v791, %v632
      %v1095 = vmul.f32 %v791, %v633
      %v1096 = vmul.f32 %v796, %v634
      %v1097 = vmul.f32 %v796, %v635
      %v1098 = vmul.f32 %v801, %v636
      %v1099 = vmul.f32 %v801, %v637
      %v1100 = vmul.f32 %v806, %v638
      %v1101 = vmul.f32 %v806, %v639
      %v1102 = vmul.f32 %v811, %v640
      %v1103 = vmul.f32 %v811, %v641
      %v1104 = vmul.f32 %v816, %v642
      %v1105 = vmul.f32 %v816, %v643
      %v1106 = vmul.f32 %v821, %v644
      %v1107 = vmul.f32 %v821, %v645
      %v1108 = vmul.f32 %v826, %v646
      %v1109 = vmul.f32 %v826, %v647
      %v1110 = vmul.f32 %v831, %v648
      %v1111 = vmul.f32 %v831, %v649
      %v1112 = vmul.f32 %v836, %v650
      %v1113 = vmul.f32 %v836, %v651
      %v1114 = vmul.f32 %v841, %v652
      %v1115 = vmul.f32 %v841, %v653
      %v1116 = vmul.f32 %v846, %v654
      %v1117 = vmul.f32 %v846, %v655
      %v1118 = vmul.f32 %v851, %v656
      %v1119 = vmul.f32 %v851, %v657
      %v1120 = vmul.f32 %v856, %v658
      %v1121 = vmul.f32 %v856, %v659
      %v1122 = vmul.f32 %v861, %v660
      %v1123 = vmul.f32 %v861, %v661
      %v1124 = vmul.f32 %v866, %v662
      %v1125 = vmul.f32 %v866, %v663
      %v1126 = vmul.f32 %v871, %v664
      %v1127 = vmul.f32 %v871, %v665
      %v1128 = vmul.f32 %v876, %v666
      %v1129 = vmul.f32 %v876, %v667
      %v1130 = vmul.f32 %v881, %v668
      %v1131 = vmul.f32 %v881, %v669
      %v1132 = vmul.f32 %v886, %v670
      %v1133 = vmul.f32 %v886, %v671
      %v1134 = vmul.f32 %v891, %v672
      %v1135 = vmul.f32 %v891, %v673
      %v1136 = vmul.f32 %v896, %v674
      %v1137 = vmul.f32 %v896, %v675
      %v1138 = vmul.f32 %v901, %v676
      %v1139 = vmul.f32 %v901, %v677
      %v1140 = vmul.f32 %v906, %v678
      %v1141 = vmul.f32 %v906, %v679
      %v1142 = vmul.f32 %v911, %v680
      %v1143 = vmul.f32 %v911, %v681
      %v1144 = vmul.f32 %v916, %v682
      %v1145 = vmul.f32 %v916, %v683
      %v1146 = vmul.f32 %v921, %v684
      %v1147 = vmul.f32 %v921, %v685
      %v1148 = vmul.f32 %v926, %v686
      %v1149 = vmul.f32 %v926, %v687
      %v1150 = vmul.f32 %v931, %v688
      %v1151 = vmul.f32 %v931, %v689
      %v1152 = vmul.f32 %v936, %v690
      %v1153 = vmul.f32 %v936, %v691
      %v1154 = vmul.f32 %v941, %v692
      %v1155 = vmul.f32 %v941, %v693
      %v1156 = vmul.f32 %v946, %v694
      %v1157 = vmul.f32 %v946, %v695
      %v1158 = vmul.f32 %v951, %v696
      %v1159 = vmul.f32 %v951, %v697
      %v1160 = vmul.f32 %v956, %v698
      %v1161 = vmul.f32 %v956, %v699
      %v1162 = vmul.f32 %v961, %v700
      %v1163 = vmul.f32 %v961, %v701
      %v1164 = vmul.f32 %v966, %v702
      %v1165 = vmul.f32 %v966, %v703
      %v1166 = vmul.f32 %v971, %v704
      %v1167 = vmul.f32 %v971, %v705
      %v1168 = vmul.f32 %v976, %v706
      %v1169 = vmul.f32 %v976, %v707
      %v1170 = vmul.f32 %v981, %v708
      %v1171 = vmul.f32 %v981, %v709
      %v1172 = vmul.f32 %v986, %v710
      %v1173 = vmul.f32 %v986, %v711
      %v1174 = vmul.f32 %v991, %v712
      %v1175 = vmul.f32 %v991, %v713
      %v1176 = vmul.f32 %v996, %v714
      %v1177 = vmul.f32 %v996, %v715
      %v1178 = vmul.f32 %v1001, %v716
      %v1179 = vmul.f32 %v1001, %v717
      %v1180 = vmul.f32 %v1006, %v718
      %v1181 = vmul.f32 %v1006, %v719
      %v1182 = vmul.f32 %v1011, %v720
      %v1183 = vmul.f32 %v1011, %v721
      %v1184 = vmul.f32 %v1016, %v722
      %v1185 = vmul.f32 %v1016, %v723
      %v1186 = vmul.f32 %v1021, %v724
      %v1187 = vmul.f32 %v1021, %v725
      %v1188 = vmul.f32 %v1026, %v726
      %v1189 = vmul.f32 %v1026, %v727
      %v1190 = vmul.f32 %v1031, %v728
      %v1191 = vmul.f32 %v1031, %v729
      %v1192 = vmul.f32 %v1036, %v730
      %v1193 = vmul.f32 %v1036, %v731
      %v1194 = vmul.f32 %v1041, %v732
      %v1195 = vmul.f32 %v1041, %v733
      %v1196 = vmul.f32 %v1046, %v734
      %v1197 = vmul.f32 %v1046, %v735
      %v1198 = vmul.f32 %v1051, %v736
      %v1199 = vmul.f32 %v1051, %v737
      %v1200 = vmul.f32 %v1056, %v738
      %v1201 = vmul.f32 %v1056, %v739
      %v1202 = vmul.f32 %v1061, %v740
      %v1203 = vmul.f32 %v1061, %v741
      %v1204 = vmul.f32 %v1066, %v742
      %v1205 = vmul.f32 %v1066, %v743
      %v1206 = vmul.f32 %v1071, %v744
      %v1207 = vmul.f32 %v1071, %v745
      %v1208 = vmul.f32 %v1076, %v746
      %v1209 = vmul.f32 %v1076, %v747
      %1210 = vst [vmem:[%s150] sm:$0xff] %v1078
      %vm1211 = vcmask 556032
      %1212 = vst.msk [vmem:[%s150 + $0x8] sm:$0xff] %vm1211, %v1079
      %1213 = vst [vmem:[%s150 + $0x10] sm:$0xff] %v1080
      %1214 = vst.msk [vmem:[%s150 + $0x18] sm:$0xff] %vm1211, %v1081
      %1215 = vst [vmem:[%s150 + $0x20] sm:$0xff] %v1082
      %1216 = vst.msk [vmem:[%s150 + $0x28] sm:$0xff] %vm1211, %v1083
      %1217 = vst [vmem:[%s150 + $0x30] sm:$0xff] %v1084
      %1218 = vst.msk [vmem:[%s150 + $0x38] sm:$0xff] %vm1211, %v1085
      %1219 = vst [vmem:[%s150 + $0x40] sm:$0xff] %v1086
      %1220 = vst.msk [vmem:[%s150 + $0x48] sm:$0xff] %vm1211, %v1087
      %1221 = vst [vmem:[%s150 + $0x50] sm:$0xff] %v1088
      %1222 = vst.msk [vmem:[%s150 + $0x58] sm:$0xff] %vm1211, %v1089
      %1223 = vst [vmem:[%s150 + $0x60] sm:$0xff] %v1090
      %1224 = vst.msk [vmem:[%s150 + $0x68] sm:$0xff] %vm1211, %v1091
      %1225 = vst [vmem:[%s150 + $0x70] sm:$0xff] %v1092
      %1226 = vst.msk [vmem:[%s150 + $0x78] sm:$0xff] %vm1211, %v1093
      %1227 = vst [vmem:[%s150 + $0x80] sm:$0xff] %v1094
      %1228 = vst.msk [vmem:[%s150 + $0x88] sm:$0xff] %vm1211, %v1095
      %1229 = vst [vmem:[%s150 + $0x90] sm:$0xff] %v1096
      %1230 = vst.msk [vmem:[%s150 + $0x98] sm:$0xff] %vm1211, %v1097
      %1231 = vst [vmem:[%s150 + $0xa0] sm:$0xff] %v1098
      %1232 = vst.msk [vmem:[%s150 + $0xa8] sm:$0xff] %vm1211, %v1099
      %1233 = vst [vmem:[%s150 + $0xb0] sm:$0xff] %v1100
      %1234 = vst.msk [vmem:[%s150 + $0xb8] sm:$0xff] %vm1211, %v1101
      %1235 = vst [vmem:[%s150 + $0xc0] sm:$0xff] %v1102
      %1236 = vst.msk [vmem:[%s150 + $0xc8] sm:$0xff] %vm1211, %v1103
      %1237 = vst [vmem:[%s150 + $0xd0] sm:$0xff] %v1104
      %1238 = vst.msk [vmem:[%s150 + $0xd8] sm:$0xff] %vm1211, %v1105
      %1239 = vst [vmem:[%s150 + $0xe0] sm:$0xff] %v1106
      %1240 = vst.msk [vmem:[%s150 + $0xe8] sm:$0xff] %vm1211, %v1107
      %1241 = vst [vmem:[%s150 + $0xf0] sm:$0xff] %v1108
      %1242 = vst.msk [vmem:[%s150 + $0xf8] sm:$0xff] %vm1211, %v1109
      %1243 = vst [vmem:[%s150 + $0x100] sm:$0xff] %v1110
      %1244 = vst.msk [vmem:[%s150 + $0x108] sm:$0xff] %vm1211, %v1111
      %1245 = vst [vmem:[%s150 + $0x110] sm:$0xff] %v1112
      %1246 = vst.msk [vmem:[%s150 + $0x118] sm:$0xff] %vm1211, %v1113
      %1247 = vst [vmem:[%s150 + $0x120] sm:$0xff] %v1114
      %1248 = vst.msk [vmem:[%s150 + $0x128] sm:$0xff] %vm1211, %v1115
      %1249 = vst [vmem:[%s150 + $0x130] sm:$0xff] %v1116
      %1250 = vst.msk [vmem:[%s150 + $0x138] sm:$0xff] %vm1211, %v1117
      %1251 = vst [vmem:[%s150 + $0x140] sm:$0xff] %v1118
      %1252 = vst.msk [vmem:[%s150 + $0x148] sm:$0xff] %vm1211, %v1119
      %1253 = vst [vmem:[%s150 + $0x150] sm:$0xff] %v1120
      %1254 = vst.msk [vmem:[%s150 + $0x158] sm:$0xff] %vm1211, %v1121
      %1255 = vst [vmem:[%s150 + $0x160] sm:$0xff] %v1122
      %1256 = vst.msk [vmem:[%s150 + $0x168] sm:$0xff] %vm1211, %v1123
      %1257 = vst [vmem:[%s150 + $0x170] sm:$0xff] %v1124
      %1258 = vst.msk [vmem:[%s150 + $0x178] sm:$0xff] %vm1211, %v1125
      %1259 = vst [vmem:[%s150 + $0x180] sm:$0xff] %v1126
      %1260 = vst.msk [vmem:[%s150 + $0x188] sm:$0xff] %vm1211, %v1127
      %1261 = vst [vmem:[%s150 + $0x190] sm:$0xff] %v1128
      %1262 = vst.msk [vmem:[%s150 + $0x198] sm:$0xff] %vm1211, %v1129
      %1263 = vst [vmem:[%s150 + $0x1a0] sm:$0xff] %v1130
      %1264 = vst.msk [vmem:[%s150 + $0x1a8] sm:$0xff] %vm1211, %v1131
      %1265 = vst [vmem:[%s150 + $0x1b0] sm:$0xff] %v1132
      %1266 = vst.msk [vmem:[%s150 + $0x1b8] sm:$0xff] %vm1211, %v1133
      %1267 = vst [vmem:[%s150 + $0x1c0] sm:$0xff] %v1134
      %1268 = vst.msk [vmem:[%s150 + $0x1c8] sm:$0xff] %vm1211, %v1135
      %1269 = vst [vmem:[%s150 + $0x1d0] sm:$0xff] %v1136
      %1270 = vst.msk [vmem:[%s150 + $0x1d8] sm:$0xff] %vm1211, %v1137
      %1271 = vst [vmem:[%s150 + $0x1e0] sm:$0xff] %v1138
      %1272 = vst.msk [vmem:[%s150 + $0x1e8] sm:$0xff] %vm1211, %v1139
      %1273 = vst [vmem:[%s150 + $0x1f0] sm:$0xff] %v1140
      %1274 = vst.msk [vmem:[%s150 + $0x1f8] sm:$0xff] %vm1211, %v1141
      %1275 = vst [vmem:[%s150 + $0x200] sm:$0xff] %v1142
      %1276 = vst.msk [vmem:[%s150 + $0x208] sm:$0xff] %vm1211, %v1143
      %1277 = vst [vmem:[%s150 + $0x210] sm:$0xff] %v1144
      %1278 = vst.msk [vmem:[%s150 + $0x218] sm:$0xff] %vm1211, %v1145
      %1279 = vst [vmem:[%s150 + $0x220] sm:$0xff] %v1146
      %1280 = vst.msk [vmem:[%s150 + $0x228] sm:$0xff] %vm1211, %v1147
      %1281 = vst [vmem:[%s150 + $0x230] sm:$0xff] %v1148
      %1282 = vst.msk [vmem:[%s150 + $0x238] sm:$0xff] %vm1211, %v1149
      %1283 = vst [vmem:[%s150 + $0x240] sm:$0xff] %v1150
      %1284 = vst.msk [vmem:[%s150 + $0x248] sm:$0xff] %vm1211, %v1151
      %1285 = vst [vmem:[%s150 + $0x250] sm:$0xff] %v1152
      %1286 = vst.msk [vmem:[%s150 + $0x258] sm:$0xff] %vm1211, %v1153
      %1287 = vst [vmem:[%s150 + $0x260] sm:$0xff] %v1154
      %1288 = vst.msk [vmem:[%s150 + $0x268] sm:$0xff] %vm1211, %v1155
      %1289 = vst [vmem:[%s150 + $0x270] sm:$0xff] %v1156
      %1290 = vst.msk [vmem:[%s150 + $0x278] sm:$0xff] %vm1211, %v1157
      %1291 = vst [vmem:[%s150 + $0x280] sm:$0xff] %v1158
      %1292 = vst.msk [vmem:[%s150 + $0x288] sm:$0xff] %vm1211, %v1159
      %1293 = vst [vmem:[%s150 + $0x290] sm:$0xff] %v1160
      %1294 = vst.msk [vmem:[%s150 + $0x298] sm:$0xff] %vm1211, %v1161
      %1295 = vst [vmem:[%s150 + $0x2a0] sm:$0xff] %v1162
      %1296 = vst.msk [vmem:[%s150 + $0x2a8] sm:$0xff] %vm1211, %v1163
      %1297 = vst [vmem:[%s150 + $0x2b0] sm:$0xff] %v1164
      %1298 = vst.msk [vmem:[%s150 + $0x2b8] sm:$0xff] %vm1211, %v1165
      %1299 = vst [vmem:[%s150 + $0x2c0] sm:$0xff] %v1166
      %1300 = vst.msk [vmem:[%s150 + $0x2c8] sm:$0xff] %vm1211, %v1167
      %1301 = vst [vmem:[%s150 + $0x2d0] sm:$0xff] %v1168
      %1302 = vst.msk [vmem:[%s150 + $0x2d8] sm:$0xff] %vm1211, %v1169
      %1303 = vst [vmem:[%s150 + $0x2e0] sm:$0xff] %v1170
      %1304 = vst.msk [vmem:[%s150 + $0x2e8] sm:$0xff] %vm1211, %v1171
      %1305 = vst [vmem:[%s150 + $0x2f0] sm:$0xff] %v1172
      %1306 = vst.msk [vmem:[%s150 + $0x2f8] sm:$0xff] %vm1211, %v1173
      %1307 = vst [vmem:[%s150 + $0x300] sm:$0xff] %v1174
      %1308 = vst.msk [vmem:[%s150 + $0x308] sm:$0xff] %vm1211, %v1175
      %1309 = vst [vmem:[%s150 + $0x310] sm:$0xff] %v1176
      %1310 = vst.msk [vmem:[%s150 + $0x318] sm:$0xff] %vm1211, %v1177
      %1311 = vst [vmem:[%s150 + $0x320] sm:$0xff] %v1178
      %1312 = vst.msk [vmem:[%s150 + $0x328] sm:$0xff] %vm1211, %v1179
      %1313 = vst [vmem:[%s150 + $0x330] sm:$0xff] %v1180
      %1314 = vst.msk [vmem:[%s150 + $0x338] sm:$0xff] %vm1211, %v1181
      %1315 = vst [vmem:[%s150 + $0x340] sm:$0xff] %v1182
      %1316 = vst.msk [vmem:[%s150 + $0x348] sm:$0xff] %vm1211, %v1183
      %1317 = vst [vmem:[%s150 + $0x350] sm:$0xff] %v1184
      %1318 = vst.msk [vmem:[%s150 + $0x358] sm:$0xff] %vm1211, %v1185
      %1319 = vst [vmem:[%s150 + $0x360] sm:$0xff] %v1186
      %1320 = vst.msk [vmem:[%s150 + $0x368] sm:$0xff] %vm1211, %v1187
      %1321 = vst [vmem:[%s150 + $0x370] sm:$0xff] %v1188
      %1322 = vst.msk [vmem:[%s150 + $0x378] sm:$0xff] %vm1211, %v1189
      %1323 = vst [vmem:[%s150 + $0x380] sm:$0xff] %v1190
      %1324 = vst.msk [vmem:[%s150 + $0x388] sm:$0xff] %vm1211, %v1191
      %1325 = vst [vmem:[%s150 + $0x390] sm:$0xff] %v1192
      %1326 = vst.msk [vmem:[%s150 + $0x398] sm:$0xff] %vm1211, %v1193
      %1327 = vst [vmem:[%s150 + $0x3a0] sm:$0xff] %v1194
      %1328 = vst.msk [vmem:[%s150 + $0x3a8] sm:$0xff] %vm1211, %v1195
      %1329 = vst [vmem:[%s150 + $0x3b0] sm:$0xff] %v1196
      %1330 = vst.msk [vmem:[%s150 + $0x3b8] sm:$0xff] %vm1211, %v1197
      %1331 = vst [vmem:[%s150 + $0x3c0] sm:$0xff] %v1198
      %1332 = vst.msk [vmem:[%s150 + $0x3c8] sm:$0xff] %vm1211, %v1199
      %1333 = vst [vmem:[%s150 + $0x3d0] sm:$0xff] %v1200
      %1334 = vst.msk [vmem:[%s150 + $0x3d8] sm:$0xff] %vm1211, %v1201
      %1335 = vst [vmem:[%s150 + $0x3e0] sm:$0xff] %v1202
      %1336 = vst.msk [vmem:[%s150 + $0x3e8] sm:$0xff] %vm1211, %v1203
      %1337 = vst [vmem:[%s150 + $0x3f0] sm:$0xff] %v1204
      %1338 = vst.msk [vmem:[%s150 + $0x3f8] sm:$0xff] %vm1211, %v1205
      %1339 = vst [vmem:[%s150 + $0x400] sm:$0xff] %v1206
      %1340 = vst.msk [vmem:[%s150 + $0x408] sm:$0xff] %vm1211, %v1207
      %1341 = vst [vmem:[%s150 + $0x410] sm:$0xff] %v1208
      %1342 = vst.msk [vmem:[%s150 + $0x418] sm:$0xff] %vm1211, %v1209
      %s1343 = smul.u32 66, %s13
      %p1344 = scmp.lt.s32.totalorder %s1343, 131
      %s1345 = scalar_select %p1344, %s1343, 131
      %s1346 = smul.addr %s1345, 2
      %s1347 = smul.addr %s1346, 8
      %s1348 = scalar_lea.vmem %s2, %s1347
      // Predicated region
      $region29: #{tpu_custom_call.1} parent=27 // pred_check
        %p1349 = pneg %p78
      $region30: #{tpu_custom_call.1} parent=27 // pred_check_branch
        %1351 = sbr.rel (%p1349) target = $region32
      $region31: #{tpu_custom_call.1} parent=27 // pred_region
        %s1352 = smul.u32 66, %s13
      $region32: #{tpu_custom_call.1} parent=27 // pred_fallthru
        _
    $region28: #{tpu_custom_call.1} parent=5 // pred_fallthru
      _
    %p1353 = scmp.le.s32.totalorder 2, %s8
    // Predicated region
    $region33: #{tpu_custom_call.1} parent=5 // pred_check
      %p1354 = pneg %p1353
    $region34: #{tpu_custom_call.1} parent=5 // pred_check_branch
      %1356 = sbr.rel (%p1354) target = $region36
    $region35: #{tpu_custom_call.1} parent=5 // pred_region
      %s1357 = ssub.s32 %s8, 2
      // Predicated region
      $region37: #{tpu_custom_call.1} parent=35 // pred_check
        %p1358 = pneg %p84
      $region38: #{tpu_custom_call.1} parent=35 // pred_check_branch
        %1360 = sbr.rel (%p1358) target = $region40
      $region39: #{tpu_custom_call.1} parent=35 // pred_region
        %s1361 = smul.u32 66, %s14
        %p1362 = scmp.lt.s32.totalorder %s1361, 131
        %s1363 = scalar_select %p1362, %s1361, 131
        %s1364 = smul.addr %s1363, 2
        %s1365 = smul.addr %s1364, 8
        %s1366 = scalar_lea.vmem %s2, %s1365
      $region40: #{tpu_custom_call.1} parent=35 // pred_fallthru
        _
    $region36: #{tpu_custom_call.1} parent=5 // pred_fallthru
      _
  $region6: #{tpu_custom_call.1} parent=0 // loop_footer
    %s12 = sadd.s32 1, %s8
  $region7: #{tpu_custom_call.1} parent=0 // loop_footer_branch
    %7 = sbr.rel target = $region3
  $region8: #{tpu_custom_call.1} parent=0 // loop_exit
    _

</llo_original>
